<compile_context>
chip_gen: v7x
topology: tpu7x:2x2x1
jax: 0.10.0
libtpu: 0.0.40
codegen_flags: <defaults>
</compile_context>

<pallas_src>
import functools

import jax
import jax.numpy as jnp
from jax.experimental import pallas as pl
from jax.experimental.pallas import tpu as pltpu


def basic_block_kernel(x_ref, w1_ref, b1_ref, w2_ref, b2_ref, mask_ref,
                       out_ref, tap_ref, *, img_w, cin, cpad):
    # x_ref:    (C, lanes)        activations: channels in sublanes, pixels in lanes
    # w*_ref:   (C, 9*cpad)       tap-major weights, BN scale folded in, Cin slabs
    #                             zero-padded to cpad (8-sublane aligned)
    # b*_ref:   (C, 1)            folded BatchNorm bias
    # mask_ref: (9, C, lanes)     0/1 border-validity mask per tap, pre-broadcast over C
    # out_ref:  (C, lanes)
    # tap_ref:  (9*cpad, lanes)   VMEM staging buffer for the 9 rolled+masked taps
    lanes = x_ref.shape[1]

    # Zero the tap-staging scratch: only rows [t*cpad, t*cpad+cin) are written
    # below, and the pad rows must hold finite zeros (their weight columns are
    # zero, but 0 * <stale-VMEM NaN> would poison the dot).  Done unconditionally
    # (not pl.when(pid==0)) so it stays correct when the parallel grid is split
    # across TensorCores, each with its own scratch instance.
    tap_ref[...] = jnp.zeros_like(tap_ref)

    x = x_ref[...]                                   # (C, lanes) f32, identity path

    def conv3x3(inp, w_ref):
        # Stage all 9 rolled+masked taps (XLU rolls + vreg-aligned VPU mask
        # multiplies + aligned sublane-slab stores), then contract channels AND
        # taps with a single MXU matmul: (C, 9*cpad) @ (9*cpad, lanes).
        for t in range(9):
            kh, kw = t // 3, t % 3
            s = (kh - 1) * img_w + (kw - 1)          # flat pixel offset of this tap
            if s == 0:
                tap = inp                            # center tap: no shift, no mask
            else:
                # shifted[p] = inp[p + s]; wrapped / cross-image lanes are zeroed
                # by the per-tap border mask.
                tap = pltpu.roll(inp, (-s) % lanes, axis=1) * mask_ref[t]
            tap_ref[pl.ds(t * cpad, cin), :] = tap
        return jnp.dot(w_ref[...], tap_ref[...],
                       preferred_element_type=jnp.float32)

    # conv1 (BN1 scale folded into w1) -> +bias -> relu
    o1 = jnp.maximum(conv3x3(x, w1_ref) + b1_ref[...], 0.0)
    # conv2 (BN2 scale folded into w2) -> +bias -> residual (downsample=None) -> relu
    o2 = conv3x3(o1, w2_ref) + b2_ref[...]
    out_ref[...] = jnp.maximum(o2 + x, 0.0)


def _pack_conv_weights(w_hwio, scale, cpad):
    """HWIO (3,3,Cin,Cout) -> (Cout, 9*cpad) tap-major, BN scale folded in."""
    kh, kw, ci, co = w_hwio.shape
    w = jnp.transpose(w_hwio.astype(jnp.float32), (3, 0, 1, 2))      # (Co,3,3,Ci)
    w = w.reshape(co, kh * kw, ci) * scale.astype(jnp.float32).reshape(co, 1, 1)
    if cpad > ci:
        w = jnp.pad(w, ((0, 0), (0, 0), (0, cpad - ci)))             # zero pad cols
    return w.reshape(co, kh * kw * cpad)


def basic_block_pallas(x_nchw, w1_hwio, s1, b1, w2_hwio, s2, b2,
                       num_lane_blocks=None):
    """x_nchw: (N, C, H, W) float32.  Weights in HWIO.  Returns (N, C, H, W)."""
    N, C, H, W = x_nchw.shape
    assert (w1_hwio.shape == (3, 3, C, C) and w2_hwio.shape == (3, 3, C, C)), \
        "BasicBlock with downsample=None requires inplanes == planes"
    HW = H * W
    # TODO(synk): pad the pixel axis (and masks) to a multiple of 128 for spatials
    # like 14x14; all shapes used here satisfy HW % 128 == 0 already.
    assert HW % 128 == 0, "pixel axis must be lane-dense (multiple of 128)"

    if num_lane_blocks is None:
        # Default: whole batch collapsed into one grid step (v5e/v6e have a single
        # TensorCore, and the kernel is per-step-overhead bound at these shapes);
        # split into 2 parallel lane blocks on dual-TensorCore v7x.
        num_lane_blocks = 1
        try:
            if "7" in jax.devices()[0].device_kind and N % 2 == 0 and N >= 2:
                num_lane_blocks = 2
        except Exception:
            pass
    assert N % num_lane_blocks == 0
    lanes_total = N * HW
    lanes_blk = lanes_total // num_lane_blocks
    assert lanes_blk % 128 == 0

    cpad = ((C + 7) // 8) * 8                        # sublane-group aligned tap slabs

    # NCHW -> (C, N*HW): channels in sublanes, images back-to-back in lanes.
    x2 = jnp.transpose(x_nchw.astype(jnp.float32).reshape(N, C, HW),
                       (1, 0, 2)).reshape(C, lanes_total)

    # BN (inference) folded:  BN(conv_w(x)) == conv_{w*s}(x) + b.
    w1p = _pack_conv_weights(w1_hwio, s1, cpad)      # (C, 9*cpad)
    w2p = _pack_conv_weights(w2_hwio, s2, cpad)
    b1r = b1.reshape(C, 1).astype(jnp.float32)
    b2r = b2.reshape(C, 1).astype(jnp.float32)

    # Per-tap border-validity masks for the pad=1 "same" conv, tiled per image
    # (so roll wrap / cross-image lanes always land on zeroed lanes) and
    # pre-broadcast over the C sublanes.
    hh = jnp.arange(HW, dtype=jnp.int32) // W
    ww = jnp.arange(HW, dtype=jnp.int32) % W
    rows = []
    for kh in range(3):
        for kw in range(3):
            dh, dw = kh - 1, kw - 1
            valid = ((hh + dh >= 0) & (hh + dh < H) &
                     (ww + dw >= 0) & (ww + dw < W)).astype(jnp.float32)
            rows.append(jnp.tile(valid, N))          # (N*HW,)
    masks = jnp.broadcast_to(jnp.stack(rows, axis=0)[:, None, :],
                             (9, C, lanes_total))    # (9, C, N*HW)

    kernel = functools.partial(basic_block_kernel, img_w=W, cin=C, cpad=cpad)

    out2 = pl.pallas_call(
        kernel,
        out_shape=jax.ShapeDtypeStruct((C, lanes_total), jnp.float32),
        grid=(num_lane_blocks,),
        in_specs=[
            pl.BlockSpec((C, lanes_blk), lambda g: (0, g)),          # x
            pl.BlockSpec((C, 9 * cpad), lambda g: (0, 0)),           # w1 (folded)
            pl.BlockSpec((C, 1), lambda g: (0, 0)),                  # b1
            pl.BlockSpec((C, 9 * cpad), lambda g: (0, 0)),           # w2 (folded)
            pl.BlockSpec((C, 1), lambda g: (0, 0)),                  # b2
            pl.BlockSpec((9, C, lanes_blk), lambda g: (0, 0, g)),    # masks
        ],
        out_specs=pl.BlockSpec((C, lanes_blk), lambda g: (0, g)),
        scratch_shapes=[pltpu.VMEM((9 * cpad, lanes_blk), jnp.float32)],
        compiler_params=pltpu.CompilerParams(
            dimension_semantics=("parallel",)),
    )(x2, w1p, b1r, w2p, b2r, masks)

    # (C, N*HW) -> NCHW (tiny, free-ish wrapper reshuffle).
    return jnp.transpose(out2.reshape(C, N, HW), (1, 0, 2)).reshape(N, C, H, W)


def ref_forward(x_nchw, w1_hwio, s1, b1, w2_hwio, s2, b2):
    """Pure-JAX reference (XLA conv) for correctness checking."""
    x = jnp.transpose(x_nchw, (0, 2, 3, 1))
    dn = ('NHWC', 'HWIO', 'NHWC')
    o = jax.lax.conv_general_dilated(x, w1_hwio, (1, 1), 'SAME',
                                     dimension_numbers=dn)
    o = jnp.maximum(o * s1 + b1, 0.0)
    o = jax.lax.conv_general_dilated(o, w2_hwio, (1, 1), 'SAME',
                                     dimension_numbers=dn)
    o = o * s2 + b2
    o = jnp.maximum(o + x, 0.0)
    return jnp.transpose(o, (0, 3, 1, 2))


if __name__ == "__main__":
    # Small shapes consistent with BasicBlock(inplanes=4, planes=4, stride=1).
    N, C, H, W = 2, 4, 16, 16
    key = jax.random.PRNGKey(0)
    kx, kw1, kw2, kg1, kb1, km1, kv1, kg2, kb2, km2, kv2 = jax.random.split(key, 11)

    x = jax.random.normal(kx, (N, C, H, W), dtype=jnp.float32)

    # conv weights: PyTorch layout (Cout, Cin, 3, 3) -> HWIO (3, 3, Cin, Cout)
    w1_oihw = jax.random.normal(kw1, (C, C, 3, 3), dtype=jnp.float32) * 0.1
    w2_oihw = jax.random.normal(kw2, (C, C, 3, 3), dtype=jnp.float32) * 0.1
    w1_hwio = jnp.transpose(w1_oihw, (2, 3, 1, 0))
    w2_hwio = jnp.transpose(w2_oihw, (2, 3, 1, 0))

    # BatchNorm (inference): fold gamma/beta/running_mean/running_var into scale+bias
    eps = 1e-5
    gamma1 = 1.0 + 0.1 * jax.random.normal(kg1, (C,), dtype=jnp.float32)
    beta1 = 0.1 * jax.random.normal(kb1, (C,), dtype=jnp.float32)
    mean1 = 0.1 * jax.random.normal(km1, (C,), dtype=jnp.float32)
    var1 = jnp.abs(jax.random.normal(kv1, (C,), dtype=jnp.float32)) + 0.5
    gamma2 = 1.0 + 0.1 * jax.random.normal(kg2, (C,), dtype=jnp.float32)
    beta2 = 0.1 * jax.random.normal(kb2, (C,), dtype=jnp.float32)
    mean2 = 0.1 * jax.random.normal(km2, (C,), dtype=jnp.float32)
    var2 = jnp.abs(jax.random.normal(kv2, (C,), dtype=jnp.float32)) + 0.5

    s1 = gamma1 / jnp.sqrt(var1 + eps)
    b1 = beta1 - mean1 * s1
    s2 = gamma2 / jnp.sqrt(var2 + eps)
    b2 = beta2 - mean2 * s2

    out = basic_block_pallas(x, w1_hwio, s1, b1, w2_hwio, s2, b2)
    out = jax.block_until_ready(out)

    ref = ref_forward(x, w1_hwio, s1, b1, w2_hwio, s2, b2)
    assert out.shape == (N, C, H, W)
    assert jnp.allclose(out, ref, atol=1e-4, rtol=1e-4), "mismatch vs XLA reference"

    print("KERNEL_OK")
</pallas_src>

<mosaic_0001>
module attributes {stable_mosaic.version = 11 : i64} {
  func.func @basic_block_kernel(%arg0: i32, %arg1: memref<4x512xf32, #tpu.memory_space<vmem>>, %arg2: memref<4x72xf32, #tpu.memory_space<vmem>>, %arg3: memref<4x1xf32, #tpu.memory_space<vmem>>, %arg4: memref<4x72xf32, #tpu.memory_space<vmem>>, %arg5: memref<4x1xf32, #tpu.memory_space<vmem>>, %arg6: memref<9x4x512xf32, #tpu.memory_space<vmem>>, %arg7: memref<4x512xf32, #tpu.memory_space<vmem>>, %arg8: memref<72x512xf32, #tpu.memory_space<vmem>>) attributes {dimension_semantics = [#tpu.dimension_semantics<parallel>], iteration_bounds = array<i64: 1>, scalar_prefetch = 0 : i64, scratch_operands = 1 : i64, tpu.core_type = #tpu.core_type<tc>, window_params = [{transform_indices = @transform_0, window_bounds = array<i64: 4, 512>}, {pipeline_mode = #tpu.pipeline_mode<synchronous>, transform_indices = @transform_1, window_bounds = array<i64: 4, 72>}, {pipeline_mode = #tpu.pipeline_mode<synchronous>, transform_indices = @transform_2, window_bounds = array<i64: 4, 1>}, {pipeline_mode = #tpu.pipeline_mode<synchronous>, transform_indices = @transform_3, window_bounds = array<i64: 4, 72>}, {pipeline_mode = #tpu.pipeline_mode<synchronous>, transform_indices = @transform_4, window_bounds = array<i64: 4, 1>}, {transform_indices = @transform_5, window_bounds = array<i64: 9, 4, 512>}, {transform_indices = @transform_6, window_bounds = array<i64: 4, 512>}]} {
    %cst = arith.constant 0.000000e+00 : f32
    %0 = vector.broadcast %cst : f32 to vector<72x512xf32>
    %c0 = arith.constant 0 : index
    %c0_0 = arith.constant 0 : index
    %1 = vector.load %arg8[%c0, %c0_0] : memref<72x512xf32, #tpu.memory_space<vmem>>, vector<72x512xf32>
    tpu.vector_store %arg8[%c0, %c0_0], %0 {strides = array<i32>} : memref<72x512xf32, #tpu.memory_space<vmem>>, vector<72x512xf32>,
    %c0_1 = arith.constant 0 : index
    %c0_2 = arith.constant 0 : index
    %2 = vector.load %arg1[%c0_1, %c0_2] : memref<4x512xf32, #tpu.memory_space<vmem>>, vector<4x512xf32>
    %c17_i32 = arith.constant 17 : i32
    %3 = tpu.dynamic_rotate %2 by %c17_i32 dim 1 : vector<4x512xf32>, i32 -> vector<4x512xf32>
    %c0_3 = arith.constant 0 : index
    %c0_4 = arith.constant 0 : index
    %c0_5 = arith.constant 0 : index
    %4 = vector.load %arg6[%c0_3, %c0_4, %c0_5] : memref<9x4x512xf32, #tpu.memory_space<vmem>>, vector<1x4x512xf32>
    %5 = vector.shape_cast %4 : vector<1x4x512xf32> to vector<4x512xf32>
    %6 = arith.mulf %3, %5 : vector<4x512xf32>
    %c0_6 = arith.constant 0 : index
    %c0_7 = arith.constant 0 : index
    %7 = vector.load %arg8[%c0_6, %c0_7] : memref<72x512xf32, #tpu.memory_space<vmem>>, vector<4x512xf32>
    tpu.vector_store %arg8[%c0_6, %c0_7], %6 {strides = array<i32>} : memref<72x512xf32, #tpu.memory_space<vmem>>, vector<4x512xf32>,
    %c16_i32 = arith.constant 16 : i32
    %8 = tpu.dynamic_rotate %2 by %c16_i32 dim 1 : vector<4x512xf32>, i32 -> vector<4x512xf32>
    %c1 = arith.constant 1 : index
    %c0_8 = arith.constant 0 : index
    %c0_9 = arith.constant 0 : index
    %9 = vector.load %arg6[%c1, %c0_8, %c0_9] : memref<9x4x512xf32, #tpu.memory_space<vmem>>, vector<1x4x512xf32>
    %10 = vector.shape_cast %9 : vector<1x4x512xf32> to vector<4x512xf32>
    %11 = arith.mulf %8, %10 : vector<4x512xf32>
    %c8 = arith.constant 8 : index
    %c0_10 = arith.constant 0 : index
    %12 = vector.load %arg8[%c8, %c0_10] : memref<72x512xf32, #tpu.memory_space<vmem>>, vector<4x512xf32>
    tpu.vector_store %arg8[%c8, %c0_10], %11 {strides = array<i32>} : memref<72x512xf32, #tpu.memory_space<vmem>>, vector<4x512xf32>,
    %c15_i32 = arith.constant 15 : i32
    %13 = tpu.dynamic_rotate %2 by %c15_i32 dim 1 : vector<4x512xf32>, i32 -> vector<4x512xf32>
    %c2 = arith.constant 2 : index
    %c0_11 = arith.constant 0 : index
    %c0_12 = arith.constant 0 : index
    %14 = vector.load %arg6[%c2, %c0_11, %c0_12] : memref<9x4x512xf32, #tpu.memory_space<vmem>>, vector<1x4x512xf32>
    %15 = vector.shape_cast %14 : vector<1x4x512xf32> to vector<4x512xf32>
    %16 = arith.mulf %13, %15 : vector<4x512xf32>
    %c16 = arith.constant 16 : index
    %c0_13 = arith.constant 0 : index
    %17 = vector.load %arg8[%c16, %c0_13] : memref<72x512xf32, #tpu.memory_space<vmem>>, vector<4x512xf32>
    tpu.vector_store %arg8[%c16, %c0_13], %16 {strides = array<i32>} : memref<72x512xf32, #tpu.memory_space<vmem>>, vector<4x512xf32>,
    %c1_i32 = arith.constant 1 : i32
    %18 = tpu.dynamic_rotate %2 by %c1_i32 dim 1 : vector<4x512xf32>, i32 -> vector<4x512xf32>
    %c3 = arith.constant 3 : index
    %c0_14 = arith.constant 0 : index
    %c0_15 = arith.constant 0 : index
    %19 = vector.load %arg6[%c3, %c0_14, %c0_15] : memref<9x4x512xf32, #tpu.memory_space<vmem>>, vector<1x4x512xf32>
    %20 = vector.shape_cast %19 : vector<1x4x512xf32> to vector<4x512xf32>
    %21 = arith.mulf %18, %20 : vector<4x512xf32>
    %c24 = arith.constant 24 : index
    %c0_16 = arith.constant 0 : index
    %22 = vector.load %arg8[%c24, %c0_16] : memref<72x512xf32, #tpu.memory_space<vmem>>, vector<4x512xf32>
    tpu.vector_store %arg8[%c24, %c0_16], %21 {strides = array<i32>} : memref<72x512xf32, #tpu.memory_space<vmem>>, vector<4x512xf32>,
    %c32 = arith.constant 32 : index
    %c0_17 = arith.constant 0 : index
    %23 = vector.load %arg8[%c32, %c0_17] : memref<72x512xf32, #tpu.memory_space<vmem>>, vector<4x512xf32>
    tpu.vector_store %arg8[%c32, %c0_17], %2 {strides = array<i32>} : memref<72x512xf32, #tpu.memory_space<vmem>>, vector<4x512xf32>,
    %c511_i32 = arith.constant 511 : i32
    %24 = tpu.dynamic_rotate %2 by %c511_i32 dim 1 : vector<4x512xf32>, i32 -> vector<4x512xf32>
    %c5 = arith.constant 5 : index
    %c0_18 = arith.constant 0 : index
    %c0_19 = arith.constant 0 : index
    %25 = vector.load %arg6[%c5, %c0_18, %c0_19] : memref<9x4x512xf32, #tpu.memory_space<vmem>>, vector<1x4x512xf32>
    %26 = vector.shape_cast %25 : vector<1x4x512xf32> to vector<4x512xf32>
    %27 = arith.mulf %24, %26 : vector<4x512xf32>
    %c40 = arith.constant 40 : index
    %c0_20 = arith.constant 0 : index
    %28 = vector.load %arg8[%c40, %c0_20] : memref<72x512xf32, #tpu.memory_space<vmem>>, vector<4x512xf32>
    tpu.vector_store %arg8[%c40, %c0_20], %27 {strides = array<i32>} : memref<72x512xf32, #tpu.memory_space<vmem>>, vector<4x512xf32>,
    %c497_i32 = arith.constant 497 : i32
    %29 = tpu.dynamic_rotate %2 by %c497_i32 dim 1 : vector<4x512xf32>, i32 -> vector<4x512xf32>
    %c6 = arith.constant 6 : index
    %c0_21 = arith.constant 0 : index
    %c0_22 = arith.constant 0 : index
    %30 = vector.load %arg6[%c6, %c0_21, %c0_22] : memref<9x4x512xf32, #tpu.memory_space<vmem>>, vector<1x4x512xf32>
    %31 = vector.shape_cast %30 : vector<1x4x512xf32> to vector<4x512xf32>
    %32 = arith.mulf %29, %31 : vector<4x512xf32>
    %c48 = arith.constant 48 : index
    %c0_23 = arith.constant 0 : index
    %33 = vector.load %arg8[%c48, %c0_23] : memref<72x512xf32, #tpu.memory_space<vmem>>, vector<4x512xf32>
    tpu.vector_store %arg8[%c48, %c0_23], %32 {strides = array<i32>} : memref<72x512xf32, #tpu.memory_space<vmem>>, vector<4x512xf32>,
    %c496_i32 = arith.constant 496 : i32
    %34 = tpu.dynamic_rotate %2 by %c496_i32 dim 1 : vector<4x512xf32>, i32 -> vector<4x512xf32>
    %c7 = arith.constant 7 : index
    %c0_24 = arith.constant 0 : index
    %c0_25 = arith.constant 0 : index
    %35 = vector.load %arg6[%c7, %c0_24, %c0_25] : memref<9x4x512xf32, #tpu.memory_space<vmem>>, vector<1x4x512xf32>
    %36 = vector.shape_cast %35 : vector<1x4x512xf32> to vector<4x512xf32>
    %37 = arith.mulf %34, %36 : vector<4x512xf32>
    %c56 = arith.constant 56 : index
    %c0_26 = arith.constant 0 : index
    %38 = vector.load %arg8[%c56, %c0_26] : memref<72x512xf32, #tpu.memory_space<vmem>>, vector<4x512xf32>
    tpu.vector_store %arg8[%c56, %c0_26], %37 {strides = array<i32>} : memref<72x512xf32, #tpu.memory_space<vmem>>, vector<4x512xf32>,
    %c495_i32 = arith.constant 495 : i32
    %39 = tpu.dynamic_rotate %2 by %c495_i32 dim 1 : vector<4x512xf32>, i32 -> vector<4x512xf32>
    %c8_27 = arith.constant 8 : index
    %c0_28 = arith.constant 0 : index
    %c0_29 = arith.constant 0 : index
    %40 = vector.load %arg6[%c8_27, %c0_28, %c0_29] : memref<9x4x512xf32, #tpu.memory_space<vmem>>, vector<1x4x512xf32>
    %41 = vector.shape_cast %40 : vector<1x4x512xf32> to vector<4x512xf32>
    %42 = arith.mulf %39, %41 : vector<4x512xf32>
    %c64 = arith.constant 64 : index
    %c0_30 = arith.constant 0 : index
    %43 = vector.load %arg8[%c64, %c0_30] : memref<72x512xf32, #tpu.memory_space<vmem>>, vector<4x512xf32>
    tpu.vector_store %arg8[%c64, %c0_30], %42 {strides = array<i32>} : memref<72x512xf32, #tpu.memory_space<vmem>>, vector<4x512xf32>,
    %c0_31 = arith.constant 0 : index
    %c0_32 = arith.constant 0 : index
    %44 = vector.load %arg2[%c0_31, %c0_32] : memref<4x72xf32, #tpu.memory_space<vmem>>, vector<4x72xf32>
    %c0_33 = arith.constant 0 : index
    %c0_34 = arith.constant 0 : index
    %45 = vector.load %arg8[%c0_33, %c0_34] : memref<72x512xf32, #tpu.memory_space<vmem>>, vector<72x512xf32>
    %cst_35 = arith.constant dense<0.000000e+00> : vector<4x512xf32>
    %46 = tpu.matmul %44, %45, %cst_35 {dimension_numbers = #tpu.dot_dimension_numbers<[1], [0], [0], [1], [0, 0, 1, 1], [], []>} : vector<4x72xf32>, vector<72x512xf32>, vector<4x512xf32> -> vector<4x512xf32>
    %c0_36 = arith.constant 0 : index
    %c0_37 = arith.constant 0 : index
    %47 = vector.load %arg3[%c0_36, %c0_37] : memref<4x1xf32, #tpu.memory_space<vmem>>, vector<4x1xf32>
    %48 = vector.broadcast %47 : vector<4x1xf32> to vector<4x512xf32>
    %49 = arith.addf %46, %48 : vector<4x512xf32>
    %cst_38 = arith.constant 0.000000e+00 : f32
    %50 = vector.broadcast %cst_38 : f32 to vector<4x512xf32>
    %51 = arith.maximumf %49, %50 : vector<4x512xf32>
    %c17_i32_39 = arith.constant 17 : i32
    %52 = tpu.dynamic_rotate %51 by %c17_i32_39 dim 1 : vector<4x512xf32>, i32 -> vector<4x512xf32>
    %c0_40 = arith.constant 0 : index
    %c0_41 = arith.constant 0 : index
    %c0_42 = arith.constant 0 : index
    %53 = vector.load %arg6[%c0_40, %c0_41, %c0_42] : memref<9x4x512xf32, #tpu.memory_space<vmem>>, vector<1x4x512xf32>
    %54 = vector.shape_cast %53 : vector<1x4x512xf32> to vector<4x512xf32>
    %55 = arith.mulf %52, %54 : vector<4x512xf32>
    %c0_43 = arith.constant 0 : index
    %c0_44 = arith.constant 0 : index
    %56 = vector.load %arg8[%c0_43, %c0_44] : memref<72x512xf32, #tpu.memory_space<vmem>>, vector<4x512xf32>
    tpu.vector_store %arg8[%c0_43, %c0_44], %55 {strides = array<i32>} : memref<72x512xf32, #tpu.memory_space<vmem>>, vector<4x512xf32>,
    %c16_i32_45 = arith.constant 16 : i32
    %57 = tpu.dynamic_rotate %51 by %c16_i32_45 dim 1 : vector<4x512xf32>, i32 -> vector<4x512xf32>
    %c1_46 = arith.constant 1 : index
    %c0_47 = arith.constant 0 : index
    %c0_48 = arith.constant 0 : index
    %58 = vector.load %arg6[%c1_46, %c0_47, %c0_48] : memref<9x4x512xf32, #tpu.memory_space<vmem>>, vector<1x4x512xf32>
    %59 = vector.shape_cast %58 : vector<1x4x512xf32> to vector<4x512xf32>
    %60 = arith.mulf %57, %59 : vector<4x512xf32>
    %c8_49 = arith.constant 8 : index
    %c0_50 = arith.constant 0 : index
    %61 = vector.load %arg8[%c8_49, %c0_50] : memref<72x512xf32, #tpu.memory_space<vmem>>, vector<4x512xf32>
    tpu.vector_store %arg8[%c8_49, %c0_50], %60 {strides = array<i32>} : memref<72x512xf32, #tpu.memory_space<vmem>>, vector<4x512xf32>,
    %c15_i32_51 = arith.constant 15 : i32
    %62 = tpu.dynamic_rotate %51 by %c15_i32_51 dim 1 : vector<4x512xf32>, i32 -> vector<4x512xf32>
    %c2_52 = arith.constant 2 : index
    %c0_53 = arith.constant 0 : index
    %c0_54 = arith.constant 0 : index
    %63 = vector.load %arg6[%c2_52, %c0_53, %c0_54] : memref<9x4x512xf32, #tpu.memory_space<vmem>>, vector<1x4x512xf32>
    %64 = vector.shape_cast %63 : vector<1x4x512xf32> to vector<4x512xf32>
    %65 = arith.mulf %62, %64 : vector<4x512xf32>
    %c16_55 = arith.constant 16 : index
    %c0_56 = arith.constant 0 : index
    %66 = vector.load %arg8[%c16_55, %c0_56] : memref<72x512xf32, #tpu.memory_space<vmem>>, vector<4x512xf32>
    tpu.vector_store %arg8[%c16_55, %c0_56], %65 {strides = array<i32>} : memref<72x512xf32, #tpu.memory_space<vmem>>, vector<4x512xf32>,
    %c1_i32_57 = arith.constant 1 : i32
    %67 = tpu.dynamic_rotate %51 by %c1_i32_57 dim 1 : vector<4x512xf32>, i32 -> vector<4x512xf32>
    %c3_58 = arith.constant 3 : index
    %c0_59 = arith.constant 0 : index
    %c0_60 = arith.constant 0 : index
    %68 = vector.load %arg6[%c3_58, %c0_59, %c0_60] : memref<9x4x512xf32, #tpu.memory_space<vmem>>, vector<1x4x512xf32>
    %69 = vector.shape_cast %68 : vector<1x4x512xf32> to vector<4x512xf32>
    %70 = arith.mulf %67, %69 : vector<4x512xf32>
    %c24_61 = arith.constant 24 : index
    %c0_62 = arith.constant 0 : index
    %71 = vector.load %arg8[%c24_61, %c0_62] : memref<72x512xf32, #tpu.memory_space<vmem>>, vector<4x512xf32>
    tpu.vector_store %arg8[%c24_61, %c0_62], %70 {strides = array<i32>} : memref<72x512xf32, #tpu.memory_space<vmem>>, vector<4x512xf32>,
    %c32_63 = arith.constant 32 : index
    %c0_64 = arith.constant 0 : index
    %72 = vector.load %arg8[%c32_63, %c0_64] : memref<72x512xf32, #tpu.memory_space<vmem>>, vector<4x512xf32>
    tpu.vector_store %arg8[%c32_63, %c0_64], %51 {strides = array<i32>} : memref<72x512xf32, #tpu.memory_space<vmem>>, vector<4x512xf32>,
    %c511_i32_65 = arith.constant 511 : i32
    %73 = tpu.dynamic_rotate %51 by %c511_i32_65 dim 1 : vector<4x512xf32>, i32 -> vector<4x512xf32>
    %c5_66 = arith.constant 5 : index
    %c0_67 = arith.constant 0 : index
    %c0_68 = arith.constant 0 : index
    %74 = vector.load %arg6[%c5_66, %c0_67, %c0_68] : memref<9x4x512xf32, #tpu.memory_space<vmem>>, vector<1x4x512xf32>
    %75 = vector.shape_cast %74 : vector<1x4x512xf32> to vector<4x512xf32>
    %76 = arith.mulf %73, %75 : vector<4x512xf32>
    %c40_69 = arith.constant 40 : index
    %c0_70 = arith.constant 0 : index
    %77 = vector.load %arg8[%c40_69, %c0_70] : memref<72x512xf32, #tpu.memory_space<vmem>>, vector<4x512xf32>
    tpu.vector_store %arg8[%c40_69, %c0_70], %76 {strides = array<i32>} : memref<72x512xf32, #tpu.memory_space<vmem>>, vector<4x512xf32>,
    %c497_i32_71 = arith.constant 497 : i32
    %78 = tpu.dynamic_rotate %51 by %c497_i32_71 dim 1 : vector<4x512xf32>, i32 -> vector<4x512xf32>
    %c6_72 = arith.constant 6 : index
    %c0_73 = arith.constant 0 : index
    %c0_74 = arith.constant 0 : index
    %79 = vector.load %arg6[%c6_72, %c0_73, %c0_74] : memref<9x4x512xf32, #tpu.memory_space<vmem>>, vector<1x4x512xf32>
    %80 = vector.shape_cast %79 : vector<1x4x512xf32> to vector<4x512xf32>
    %81 = arith.mulf %78, %80 : vector<4x512xf32>
    %c48_75 = arith.constant 48 : index
    %c0_76 = arith.constant 0 : index
    %82 = vector.load %arg8[%c48_75, %c0_76] : memref<72x512xf32, #tpu.memory_space<vmem>>, vector<4x512xf32>
    tpu.vector_store %arg8[%c48_75, %c0_76], %81 {strides = array<i32>} : memref<72x512xf32, #tpu.memory_space<vmem>>, vector<4x512xf32>,
    %c496_i32_77 = arith.constant 496 : i32
    %83 = tpu.dynamic_rotate %51 by %c496_i32_77 dim 1 : vector<4x512xf32>, i32 -> vector<4x512xf32>
    %c7_78 = arith.constant 7 : index
    %c0_79 = arith.constant 0 : index
    %c0_80 = arith.constant 0 : index
    %84 = vector.load %arg6[%c7_78, %c0_79, %c0_80] : memref<9x4x512xf32, #tpu.memory_space<vmem>>, vector<1x4x512xf32>
    %85 = vector.shape_cast %84 : vector<1x4x512xf32> to vector<4x512xf32>
    %86 = arith.mulf %83, %85 : vector<4x512xf32>
    %c56_81 = arith.constant 56 : index
    %c0_82 = arith.constant 0 : index
    %87 = vector.load %arg8[%c56_81, %c0_82] : memref<72x512xf32, #tpu.memory_space<vmem>>, vector<4x512xf32>
    tpu.vector_store %arg8[%c56_81, %c0_82], %86 {strides = array<i32>} : memref<72x512xf32, #tpu.memory_space<vmem>>, vector<4x512xf32>,
    %c495_i32_83 = arith.constant 495 : i32
    %88 = tpu.dynamic_rotate %51 by %c495_i32_83 dim 1 : vector<4x512xf32>, i32 -> vector<4x512xf32>
    %c8_84 = arith.constant 8 : index
    %c0_85 = arith.constant 0 : index
    %c0_86 = arith.constant 0 : index
    %89 = vector.load %arg6[%c8_84, %c0_85, %c0_86] : memref<9x4x512xf32, #tpu.memory_space<vmem>>, vector<1x4x512xf32>
    %90 = vector.shape_cast %89 : vector<1x4x512xf32> to vector<4x512xf32>
    %91 = arith.mulf %88, %90 : vector<4x512xf32>
    %c64_87 = arith.constant 64 : index
    %c0_88 = arith.constant 0 : index
    %92 = vector.load %arg8[%c64_87, %c0_88] : memref<72x512xf32, #tpu.memory_space<vmem>>, vector<4x512xf32>
    tpu.vector_store %arg8[%c64_87, %c0_88], %91 {strides = array<i32>} : memref<72x512xf32, #tpu.memory_space<vmem>>, vector<4x512xf32>,
    %c0_89 = arith.constant 0 : index
    %c0_90 = arith.constant 0 : index
    %93 = vector.load %arg4[%c0_89, %c0_90] : memref<4x72xf32, #tpu.memory_space<vmem>>, vector<4x72xf32>
    %c0_91 = arith.constant 0 : index
    %c0_92 = arith.constant 0 : index
    %94 = vector.load %arg8[%c0_91, %c0_92] : memref<72x512xf32, #tpu.memory_space<vmem>>, vector<72x512xf32>
    %cst_93 = arith.constant dense<0.000000e+00> : vector<4x512xf32>
    %95 = tpu.matmul %93, %94, %cst_93 {dimension_numbers = #tpu.dot_dimension_numbers<[1], [0], [0], [1], [0, 0, 1, 1], [], []>} : vector<4x72xf32>, vector<72x512xf32>, vector<4x512xf32> -> vector<4x512xf32>
    %c0_94 = arith.constant 0 : index
    %c0_95 = arith.constant 0 : index
    %96 = vector.load %arg5[%c0_94, %c0_95] : memref<4x1xf32, #tpu.memory_space<vmem>>, vector<4x1xf32>
    %97 = vector.broadcast %96 : vector<4x1xf32> to vector<4x512xf32>
    %98 = arith.addf %95, %97 : vector<4x512xf32>
    %99 = arith.addf %98, %2 : vector<4x512xf32>
    %cst_96 = arith.constant 0.000000e+00 : f32
    %100 = vector.broadcast %cst_96 : f32 to vector<4x512xf32>
    %101 = arith.maximumf %99, %100 : vector<4x512xf32>
    %c0_97 = arith.constant 0 : index
    %c0_98 = arith.constant 0 : index
    %102 = vector.load %arg7[%c0_97, %c0_98] : memref<4x512xf32, #tpu.memory_space<vmem>>, vector<4x512xf32>
    tpu.vector_store %arg7[%c0_97, %c0_98], %101 {strides = array<i32>} : memref<4x512xf32, #tpu.memory_space<vmem>>, vector<4x512xf32>,
    return
  }
  func.func @transform_0(%arg0: i32) -> (i32, i32) {
    %c0_i32 = arith.constant 0 : i32
    %c0_i32_0 = arith.constant 0 : i32
    return %c0_i32, %arg0 : i32, i32
  }
  func.func @transform_1(%arg0: i32) -> (i32, i32) {
    %c0_i32 = arith.constant 0 : i32
    %c0_i32_0 = arith.constant 0 : i32
    %c0_i32_1 = arith.constant 0 : i32
    return %c0_i32, %c0_i32_0 : i32, i32
  }
  func.func @transform_2(%arg0: i32) -> (i32, i32) {
    %c0_i32 = arith.constant 0 : i32
    %c0_i32_0 = arith.constant 0 : i32
    %c0_i32_1 = arith.constant 0 : i32
    return %c0_i32, %c0_i32_0 : i32, i32
  }
  func.func @transform_3(%arg0: i32) -> (i32, i32) {
    %c0_i32 = arith.constant 0 : i32
    %c0_i32_0 = arith.constant 0 : i32
    %c0_i32_1 = arith.constant 0 : i32
    return %c0_i32, %c0_i32_0 : i32, i32
  }
  func.func @transform_4(%arg0: i32) -> (i32, i32) {
    %c0_i32 = arith.constant 0 : i32
    %c0_i32_0 = arith.constant 0 : i32
    %c0_i32_1 = arith.constant 0 : i32
    return %c0_i32, %c0_i32_0 : i32, i32
  }
  func.func @transform_5(%arg0: i32) -> (i32, i32, i32) {
    %c0_i32 = arith.constant 0 : i32
    %c0_i32_0 = arith.constant 0 : i32
    %c0_i32_1 = arith.constant 0 : i32
    return %c0_i32, %c0_i32_0, %arg0 : i32, i32, i32
  }
  func.func @transform_6(%arg0: i32) -> (i32, i32) {
    %c0_i32 = arith.constant 0 : i32
    %c0_i32_0 = arith.constant 0 : i32
    return %c0_i32, %arg0 : i32, i32
  }
}

</mosaic_0001>

<llo_original>
// kernel: tpu_custom_call.1
$region0: #{tpu_custom_call.1}
  #allocation0 [shape = 'u32[]', space=smem, size = 0x4, offset = 0x4, fixed_abs, tag = 'smem constant byte address 0x4 - core index']
  #allocation1 [shape = 'u32[144,128]{1,0:T(1,128)}', space=vmem, size = 0x12000, scoped, tag = 'internal scratch']
  #allocation2 [shape = 'f32[72,512]{1,0:T(8,128)}', space=vmem, size = 0x24000, scoped, tag = 'scratch operand']
  %s0 = inlined_call_operand.hbm [shape: f32[4,512], index: 0, kind: input, shape index: {}]
  %s1 = inlined_call_operand.vmem [shape: f32[4,72], index: 1, kind: input, shape index: {}]
  %s2 = inlined_call_operand.vmem [shape: f32[4,1], index: 2, kind: input, shape index: {}]
  %s3 = inlined_call_operand.vmem [shape: f32[4,72], index: 3, kind: input, shape index: {}]
  %s4 = inlined_call_operand.vmem [shape: f32[4,1], index: 4, kind: input, shape index: {}]
  %s5 = inlined_call_operand.hbm [shape: f32[9,4,512], index: 5, kind: input, shape index: {}]
  %s6 = inlined_call_operand.hbm [shape: f32[4,512], index: 6, kind: output, shape index: {}]
  %s7 = sld [smem:[#allocation0]]
  $region42: #{tpu_custom_call.1} parent=0
    _
  %s9 = ssub.s32 1, %s7
  %s10 = scalar_select 0, %s9, %s7
  $region1: #{tpu_custom_call.1} parent=0
    #allocation3 [shape = 'u8[8192]{0}', space=vmem, size = 0x2000, scoped, tag = 'input window, operand 0, single buffered']
    #allocation4 [shape = 's32[1]{0}', space=sflag, size = 0x4, scoped, tag = 'scoped memory for tpu_custom_call.1']
    #allocation5 [shape = 's32[1]{0}', space=sflag, size = 0x4, scoped, tag = 'scoped memory for tpu_custom_call.1']
    #allocation6 [shape = 'u8[73728]{0}', space=vmem, size = 0x12000, scoped, tag = 'input window, operand 5, single buffered']
    #allocation7 [shape = 's32[1]{0}', space=sflag, size = 0x4, scoped, tag = 'scoped memory for tpu_custom_call.1']
    #allocation8 [shape = 'u8[8192]{0}', space=vmem, size = 0x2000, scoped, tag = 'output window, operand 0, single buffered']
    %11 = vsyncpa [#allocation4], 0
    %12 = vsyncpa [#allocation7], 0
    %13 = vsyncpa [#allocation5], 0
    // Predicated region
    $region2: #{tpu_custom_call.1} parent=1 // pred_check
      _
    $region3: #{tpu_custom_call.1} parent=1 // pred_check_branch
      %15 = sbr.rel (0) target = $region5
    $region4: #{tpu_custom_call.1} parent=1 // pred_region
      %s17 = ssub.s32 256, 256
      %18 = vsyncadd [#allocation4], %s17
      %s20 = sshll.u32 [#allocation3], 4
      %s21 = int_to_ptr.vmem [resolvable:$true] %s20
      %23 = dma.hbm_to_vmem [thread:$0]  %s0, 256, %s21, [#allocation4]
    $region5: #{tpu_custom_call.1} parent=1 // pred_fallthru
      _
    // Predicated region
    $region6: #{tpu_custom_call.1} parent=1 // pred_check
      _
    $region7: #{tpu_custom_call.1} parent=1 // pred_check_branch
      %25 = sbr.rel (0) target = $region9
    $region8: #{tpu_custom_call.1} parent=1 // pred_region
      _
    $region9: #{tpu_custom_call.1} parent=1 // pred_fallthru
      _
    // Predicated region
    $region10: #{tpu_custom_call.1} parent=1 // pred_check
      _
    $region11: #{tpu_custom_call.1} parent=1 // pred_check_branch
      %27 = sbr.rel (0) target = $region13
    $region12: #{tpu_custom_call.1} parent=1 // pred_region
      _
    $region13: #{tpu_custom_call.1} parent=1 // pred_fallthru
      _
    // Predicated region
    $region14: #{tpu_custom_call.1} parent=1 // pred_check
      _
    $region15: #{tpu_custom_call.1} parent=1 // pred_check_branch
      %29 = sbr.rel (0) target = $region17
    $region16: #{tpu_custom_call.1} parent=1 // pred_region
      _
    $region17: #{tpu_custom_call.1} parent=1 // pred_fallthru
      _
    // Predicated region
    $region18: #{tpu_custom_call.1} parent=1 // pred_check
      _
    $region19: #{tpu_custom_call.1} parent=1 // pred_check_branch
      %31 = sbr.rel (0) target = $region21
    $region20: #{tpu_custom_call.1} parent=1 // pred_region
      _
    $region21: #{tpu_custom_call.1} parent=1 // pred_fallthru
      _
    // Predicated region
    $region22: #{tpu_custom_call.1} parent=1 // pred_check
      _
    $region23: #{tpu_custom_call.1} parent=1 // pred_check_branch
      %33 = sbr.rel (0) target = $region25
    $region24: #{tpu_custom_call.1} parent=1 // pred_region
      %s35 = ssub.s32 2304, 2304
      %36 = vsyncadd [#allocation7], %s35
      %s37 = sshll.u32 [#allocation6], 4
      %s38 = int_to_ptr.vmem [resolvable:$true] %s37
      %43 = dma.hbm_to_vmem [thread:$0]  %s5, 2304, %s38, [#allocation7], 256, 256, 16
    $region25: #{tpu_custom_call.1} parent=1 // pred_fallthru
      _
    // Predicated region
    $region26: #{tpu_custom_call.1} parent=1 // pred_check
      _
    $region27: #{tpu_custom_call.1} parent=1 // pred_check_branch
      %45 = sbr.rel (0) target = $region29
    $region28: #{tpu_custom_call.1} parent=1 // pred_region
      %46 = dma.done [#allocation4], 256
    $region29: #{tpu_custom_call.1} parent=1 // pred_fallthru
      _
    // Predicated region
    $region30: #{tpu_custom_call.1} parent=1 // pred_check
      _
    $region31: #{tpu_custom_call.1} parent=1 // pred_check_branch
      %48 = sbr.rel (0) target = $region33
    $region32: #{tpu_custom_call.1} parent=1 // pred_region
      %49 = dma.done [#allocation7], 2304
    $region33: #{tpu_custom_call.1} parent=1 // pred_fallthru
      _
    %50 = vst [vmem:[#allocation2] sm:$0xff] 0.0
    %51 = vst [vmem:[#allocation2 + $0x8] sm:$0xff] 0.0
    %52 = vst [vmem:[#allocation2 + $0x10] sm:$0xff] 0.0
    %53 = vst [vmem:[#allocation2 + $0x18] sm:$0xff] 0.0
    %54 = vst [vmem:[#allocation2 + $0x20] sm:$0xff] 0.0
    %55 = vst [vmem:[#allocation2 + $0x28] sm:$0xff] 0.0
    %56 = vst [vmem:[#allocation2 + $0x30] sm:$0xff] 0.0
    %57 = vst [vmem:[#allocation2 + $0x38] sm:$0xff] 0.0
    %58 = vst [vmem:[#allocation2 + $0x40] sm:$0xff] 0.0
    %59 = vst [vmem:[#allocation2 + $0x48] sm:$0xff] 0.0
    %60 = vst [vmem:[#allocation2 + $0x50] sm:$0xff] 0.0
    %61 = vst [vmem:[#allocation2 + $0x58] sm:$0xff] 0.0
    %62 = vst [vmem:[#allocation2 + $0x60] sm:$0xff] 0.0
    %63 = vst [vmem:[#allocation2 + $0x68] sm:$0xff] 0.0
    %64 = vst [vmem:[#allocation2 + $0x70] sm:$0xff] 0.0
    %65 = vst [vmem:[#allocation2 + $0x78] sm:$0xff] 0.0
    %66 = vst [vmem:[#allocation2 + $0x80] sm:$0xff] 0.0
    %67 = vst [vmem:[#allocation2 + $0x88] sm:$0xff] 0.0
    %68 = vst [vmem:[#allocation2 + $0x90] sm:$0xff] 0.0
    %69 = vst [vmem:[#allocation2 + $0x98] sm:$0xff] 0.0
    %70 = vst [vmem:[#allocation2 + $0xa0] sm:$0xff] 0.0
    %71 = vst [vmem:[#allocation2 + $0xa8] sm:$0xff] 0.0
    %72 = vst [vmem:[#allocation2 + $0xb0] sm:$0xff] 0.0
    %73 = vst [vmem:[#allocation2 + $0xb8] sm:$0xff] 0.0
    %74 = vst [vmem:[#allocation2 + $0xc0] sm:$0xff] 0.0
    %75 = vst [vmem:[#allocation2 + $0xc8] sm:$0xff] 0.0
    %76 = vst [vmem:[#allocation2 + $0xd0] sm:$0xff] 0.0
    %77 = vst [vmem:[#allocation2 + $0xd8] sm:$0xff] 0.0
    %78 = vst [vmem:[#allocation2 + $0xe0] sm:$0xff] 0.0
    %79 = vst [vmem:[#allocation2 + $0xe8] sm:$0xff] 0.0
    %80 = vst [vmem:[#allocation2 + $0xf0] sm:$0xff] 0.0
    %81 = vst [vmem:[#allocation2 + $0xf8] sm:$0xff] 0.0
    %82 = vst [vmem:[#allocation2 + $0x100] sm:$0xff] 0.0
    %83 = vst [vmem:[#allocation2 + $0x108] sm:$0xff] 0.0
    %84 = vst [vmem:[#allocation2 + $0x110] sm:$0xff] 0.0
    %85 = vst [vmem:[#allocation2 + $0x118] sm:$0xff] 0.0
    %v86 = vld [vmem:[#allocation3] sm:$0xff]
    %v87 = vld [vmem:[#allocation3 + $0x8] sm:$0xff]
    %v90 = vcombine.high %v86, %v86
    %v91 = vcombine.high %v87, %v87
    %94 = vrot.lane.b32.xlu0 %v86, 17
    %v95 = vpop.permute.xlu0 %94
    %96 = vrot.lane.b32.xlu0 %v90, 17
    %v97 = vpop.permute.xlu0 %96
    %98 = vrot.lane.b32.xlu0 %v87, 17
    %v99 = vpop.permute.xlu0 %98
    %100 = vrot.lane.b32.xlu0 %v91, 17
    %v101 = vpop.permute.xlu0 %100
    %v102 = vlaneseq
    %v103 = vand.u32 %v102, 127
    %vm104 = vcmp.lt.s32.totalorder %v103, 17
    %v105 = vsel %vm104, %v99, %v101
    %v106 = vsel %vm104, %v97, %v99
    %v107 = vsel %vm104, %v95, %v97
    %v108 = vsel %vm104, %v101, %v95
    %v109 = vld [vmem:[#allocation6] sm:$0xff]
    %v110 = vld [vmem:[#allocation6 + $0x8] sm:$0xff]
    %v113 = vcombine.high %v109, %v109
    %v114 = vcombine.high %v110, %v110
    %v117 = vmul.f32 %v108, %v109
    %v118 = vmul.f32 %v107, %v113
    %v119 = vmul.f32 %v106, %v110
    %v120 = vmul.f32 %v105, %v114
    %121 = vst [vmem:[#allocation2] sm:$0xf] %v117
    %122 = vst [vmem:[#allocation2 + $0x8] sm:$0xf] %v118
    %123 = vst [vmem:[#allocation2 + $0x10] sm:$0xf] %v119
    %124 = vst [vmem:[#allocation2 + $0x18] sm:$0xf] %v120
    %125 = vrot.lane.b32.xlu0 %v86, 16
    %v126 = vpop.permute.xlu0 %125
    %127 = vrot.lane.b32.xlu0 %v90, 16
    %v128 = vpop.permute.xlu0 %127
    %129 = vrot.lane.b32.xlu0 %v87, 16
    %v130 = vpop.permute.xlu0 %129
    %131 = vrot.lane.b32.xlu0 %v91, 16
    %v132 = vpop.permute.xlu0 %131
    %vm133 = vcmp.lt.s32.totalorder %v103, 16
    %v134 = vsel %vm133, %v130, %v132
    %v135 = vsel %vm133, %v128, %v130
    %v136 = vsel %vm133, %v126, %v128
    %v137 = vsel %vm133, %v132, %v126
    %s138 = scalar_lea.vmem [#allocation6], 16
    %v139 = vld [vmem:[%s138] sm:$0xff]
    %v140 = vld [vmem:[%s138 + $0x8] sm:$0xff]
    %v143 = vcombine.high %v139, %v139
    %v144 = vcombine.high %v140, %v140
    %v147 = vmul.f32 %v137, %v139
    %v148 = vmul.f32 %v136, %v143
    %v149 = vmul.f32 %v135, %v140
    %v150 = vmul.f32 %v134, %v144
    %151 = vst [vmem:[#allocation2 + $0x20] sm:$0xf] %v147
    %152 = vst [vmem:[#allocation2 + $0x28] sm:$0xf] %v148
    %153 = vst [vmem:[#allocation2 + $0x30] sm:$0xf] %v149
    %154 = vst [vmem:[#allocation2 + $0x38] sm:$0xf] %v150
    %155 = vrot.lane.b32.xlu0 %v86, 15
    %v156 = vpop.permute.xlu0 %155
    %157 = vrot.lane.b32.xlu0 %v90, 15
    %v158 = vpop.permute.xlu0 %157
    %159 = vrot.lane.b32.xlu0 %v87, 15
    %v160 = vpop.permute.xlu0 %159
    %161 = vrot.lane.b32.xlu0 %v91, 15
    %v162 = vpop.permute.xlu0 %161
    %vm163 = vcmp.lt.s32.totalorder %v103, 15
    %v164 = vsel %vm163, %v160, %v162
    %v165 = vsel %vm163, %v158, %v160
    %v166 = vsel %vm163, %v156, %v158
    %v167 = vsel %vm163, %v162, %v156
    %s168 = scalar_lea.vmem [#allocation6], 32
    %v169 = vld [vmem:[%s168] sm:$0xff]
    %v170 = vld [vmem:[%s168 + $0x8] sm:$0xff]
    %v173 = vcombine.high %v169, %v169
    %v174 = vcombine.high %v170, %v170
    %v177 = vmul.f32 %v167, %v169
    %v178 = vmul.f32 %v166, %v173
    %v179 = vmul.f32 %v165, %v170
    %v180 = vmul.f32 %v164, %v174
    %181 = vst [vmem:[#allocation2 + $0x40] sm:$0xf] %v177
    %182 = vst [vmem:[#allocation2 + $0x48] sm:$0xf] %v178
    %183 = vst [vmem:[#allocation2 + $0x50] sm:$0xf] %v179
    %184 = vst [vmem:[#allocation2 + $0x58] sm:$0xf] %v180
    %185 = vrot.lane.b32.xlu0 %v86, 1
    %v186 = vpop.permute.xlu0 %185
    %187 = vrot.lane.b32.xlu0 %v90, 1
    %v188 = vpop.permute.xlu0 %187
    %189 = vrot.lane.b32.xlu0 %v87, 1
    %v190 = vpop.permute.xlu0 %189
    %191 = vrot.lane.b32.xlu0 %v91, 1
    %v192 = vpop.permute.xlu0 %191
    %vm193 = vcmp.lt.s32.totalorder %v103, 1
    %v194 = vsel %vm193, %v190, %v192
    %v195 = vsel %vm193, %v188, %v190
    %v196 = vsel %vm193, %v186, %v188
    %v197 = vsel %vm193, %v192, %v186
    %s198 = scalar_lea.vmem [#allocation6], 48
    %v199 = vld [vmem:[%s198] sm:$0xff]
    %v200 = vld [vmem:[%s198 + $0x8] sm:$0xff]
    %v203 = vcombine.high %v199, %v199
    %v204 = vcombine.high %v200, %v200
    %v207 = vmul.f32 %v197, %v199
    %v208 = vmul.f32 %v196, %v203
    %v209 = vmul.f32 %v195, %v200
    %v210 = vmul.f32 %v194, %v204
    %211 = vst [vmem:[#allocation2 + $0x60] sm:$0xf] %v207
    %212 = vst [vmem:[#allocation2 + $0x68] sm:$0xf] %v208
    %213 = vst [vmem:[#allocation2 + $0x70] sm:$0xf] %v209
    %214 = vst [vmem:[#allocation2 + $0x78] sm:$0xf] %v210
    %215 = vst [vmem:[#allocation2 + $0x80] sm:$0xf] %v86
    %216 = vst [vmem:[#allocation2 + $0x88] sm:$0xf] %v90
    %217 = vst [vmem:[#allocation2 + $0x90] sm:$0xf] %v87
    %218 = vst [vmem:[#allocation2 + $0x98] sm:$0xf] %v91
    %219 = vrot.lane.b32.xlu0 %v86, 127
    %v220 = vpop.permute.xlu0 %219
    %221 = vrot.lane.b32.xlu0 %v90, 127
    %v222 = vpop.permute.xlu0 %221
    %223 = vrot.lane.b32.xlu0 %v87, 127
    %v224 = vpop.permute.xlu0 %223
    %225 = vrot.lane.b32.xlu0 %v91, 127
    %v226 = vpop.permute.xlu0 %225
    %vm227 = vcmp.lt.s32.totalorder %v103, 127
    %v228 = vsel %vm227, %v224, %v226
    %v229 = vsel %vm227, %v222, %v224
    %v230 = vsel %vm227, %v220, %v222
    %v231 = vsel %vm227, %v226, %v220
    %s232 = scalar_lea.vmem [#allocation6], 80
    %v233 = vld [vmem:[%s232] sm:$0xff]
    %v234 = vld [vmem:[%s232 + $0x8] sm:$0xff]
    %v237 = vcombine.high %v233, %v233
    %v238 = vcombine.high %v234, %v234
    %v241 = vmul.f32 %v230, %v233
    %v242 = vmul.f32 %v229, %v237
    %v243 = vmul.f32 %v228, %v234
    %v244 = vmul.f32 %v231, %v238
    %245 = vst [vmem:[#allocation2 + $0xa0] sm:$0xf] %v241
    %246 = vst [vmem:[#allocation2 + $0xa8] sm:$0xf] %v242
    %247 = vst [vmem:[#allocation2 + $0xb0] sm:$0xf] %v243
    %248 = vst [vmem:[#allocation2 + $0xb8] sm:$0xf] %v244
    %249 = vrot.lane.b32.xlu0 %v86, 113
    %v250 = vpop.permute.xlu0 %249
    %251 = vrot.lane.b32.xlu0 %v90, 113
    %v252 = vpop.permute.xlu0 %251
    %253 = vrot.lane.b32.xlu0 %v87, 113
    %v254 = vpop.permute.xlu0 %253
    %255 = vrot.lane.b32.xlu0 %v91, 113
    %v256 = vpop.permute.xlu0 %255
    %vm257 = vcmp.lt.s32.totalorder %v103, 113
    %v258 = vsel %vm257, %v254, %v256
    %v259 = vsel %vm257, %v252, %v254
    %v260 = vsel %vm257, %v250, %v252
    %v261 = vsel %vm257, %v256, %v250
    %s262 = scalar_lea.vmem [#allocation6], 96
    %v263 = vld [vmem:[%s262] sm:$0xff]
    %v264 = vld [vmem:[%s262 + $0x8] sm:$0xff]
    %v267 = vcombine.high %v263, %v263
    %v268 = vcombine.high %v264, %v264
    %v271 = vmul.f32 %v260, %v263
    %v272 = vmul.f32 %v259, %v267
    %v273 = vmul.f32 %v258, %v264
    %v274 = vmul.f32 %v261, %v268
    %275 = vst [vmem:[#allocation2 + $0xc0] sm:$0xf] %v271
    %276 = vst [vmem:[#allocation2 + $0xc8] sm:$0xf] %v272
    %277 = vst [vmem:[#allocation2 + $0xd0] sm:$0xf] %v273
    %278 = vst [vmem:[#allocation2 + $0xd8] sm:$0xf] %v274
    %279 = vrot.lane.b32.xlu0 %v86, 112
    %v280 = vpop.permute.xlu0 %279
    %281 = vrot.lane.b32.xlu0 %v90, 112
    %v282 = vpop.permute.xlu0 %281
    %283 = vrot.lane.b32.xlu0 %v87, 112
    %v284 = vpop.permute.xlu0 %283
    %285 = vrot.lane.b32.xlu0 %v91, 112
    %v286 = vpop.permute.xlu0 %285
    %vm287 = vcmp.lt.s32.totalorder %v103, 112
    %v288 = vsel %vm287, %v284, %v286
    %v289 = vsel %vm287, %v282, %v284
    %v290 = vsel %vm287, %v280, %v282
    %v291 = vsel %vm287, %v286, %v280
    %s292 = scalar_lea.vmem [#allocation6], 112
    %v293 = vld [vmem:[%s292] sm:$0xff]
    %v294 = vld [vmem:[%s292 + $0x8] sm:$0xff]
    %v297 = vcombine.high %v293, %v293
    %v298 = vcombine.high %v294, %v294
    %v301 = vmul.f32 %v290, %v293
    %v302 = vmul.f32 %v289, %v297
    %v303 = vmul.f32 %v288, %v294
    %v304 = vmul.f32 %v291, %v298
    %305 = vst [vmem:[#allocation2 + $0xe0] sm:$0xf] %v301
    %306 = vst [vmem:[#allocation2 + $0xe8] sm:$0xf] %v302
    %307 = vst [vmem:[#allocation2 + $0xf0] sm:$0xf] %v303
    %308 = vst [vmem:[#allocation2 + $0xf8] sm:$0xf] %v304
    %309 = vrot.lane.b32.xlu0 %v86, 111
    %v310 = vpop.permute.xlu0 %309
    %311 = vrot.lane.b32.xlu0 %v90, 111
    %v312 = vpop.permute.xlu0 %311
    %313 = vrot.lane.b32.xlu0 %v87, 111
    %v314 = vpop.permute.xlu0 %313
    %315 = vrot.lane.b32.xlu0 %v91, 111
    %v316 = vpop.permute.xlu0 %315
    %vm317 = vcmp.lt.s32.totalorder %v103, 111
    %v318 = vsel %vm317, %v314, %v316
    %v319 = vsel %vm317, %v312, %v314
    %v320 = vsel %vm317, %v310, %v312
    %v321 = vsel %vm317, %v316, %v310
    %s322 = scalar_lea.vmem [#allocation6], 128
    %v323 = vld [vmem:[%s322] sm:$0xff]
    %v324 = vld [vmem:[%s322 + $0x8] sm:$0xff]
    %v327 = vcombine.high %v323, %v323
    %v328 = vcombine.high %v324, %v324
    %v331 = vmul.f32 %v320, %v323
    %v332 = vmul.f32 %v319, %v327
    %v333 = vmul.f32 %v318, %v324
    %v334 = vmul.f32 %v321, %v328
    %335 = vst [vmem:[#allocation2 + $0x100] sm:$0xf] %v331
    %336 = vst [vmem:[#allocation2 + $0x108] sm:$0xf] %v332
    %337 = vst [vmem:[#allocation2 + $0x110] sm:$0xf] %v333
    %338 = vst [vmem:[#allocation2 + $0x118] sm:$0xf] %v334
    %v339 = vld [vmem:[%s1] sm:$0xf]
    %v340 = vld [vmem:[#allocation2] sm:$0xff]
    %v341 = vld [vmem:[#allocation2 + $0x8] sm:$0xff]
    %v342 = vld [vmem:[#allocation2 + $0x10] sm:$0xff]
    %v343 = vld [vmem:[#allocation2 + $0x18] sm:$0xff]
    %v344 = vld [vmem:[#allocation2 + $0x20] sm:$0xff]
    %v345 = vld [vmem:[#allocation2 + $0x28] sm:$0xff]
    %v346 = vld [vmem:[#allocation2 + $0x30] sm:$0xff]
    %v347 = vld [vmem:[#allocation2 + $0x38] sm:$0xff]
    %v348 = vld [vmem:[#allocation2 + $0x40] sm:$0xff]
    %v349 = vld [vmem:[#allocation2 + $0x48] sm:$0xff]
    %v350 = vld [vmem:[#allocation2 + $0x50] sm:$0xff]
    %v351 = vld [vmem:[#allocation2 + $0x58] sm:$0xff]
    %v352 = vld [vmem:[#allocation2 + $0x60] sm:$0xff]
    %v353 = vld [vmem:[#allocation2 + $0x68] sm:$0xff]
    %v354 = vld [vmem:[#allocation2 + $0x70] sm:$0xff]
    %v355 = vld [vmem:[#allocation2 + $0x78] sm:$0xff]
    %v356 = vld [vmem:[#allocation2 + $0x80] sm:$0xff]
    %v357 = vld [vmem:[#allocation2 + $0x88] sm:$0xff]
    %v358 = vld [vmem:[#allocation2 + $0x90] sm:$0xff]
    %v359 = vld [vmem:[#allocation2 + $0x98] sm:$0xff]
    %v360 = vld [vmem:[#allocation2 + $0xa0] sm:$0xff]
    %v361 = vld [vmem:[#allocation2 + $0xa8] sm:$0xff]
    %v362 = vld [vmem:[#allocation2 + $0xb0] sm:$0xff]
    %v363 = vld [vmem:[#allocation2 + $0xb8] sm:$0xff]
    %v364 = vld [vmem:[#allocation2 + $0xc0] sm:$0xff]
    %v365 = vld [vmem:[#allocation2 + $0xc8] sm:$0xff]
    %v366 = vld [vmem:[#allocation2 + $0xd0] sm:$0xff]
    %v367 = vld [vmem:[#allocation2 + $0xd8] sm:$0xff]
    %v368 = vld [vmem:[#allocation2 + $0xe0] sm:$0xff]
    %v369 = vld [vmem:[#allocation2 + $0xe8] sm:$0xff]
    %v370 = vld [vmem:[#allocation2 + $0xf0] sm:$0xff]
    %v371 = vld [vmem:[#allocation2 + $0xf8] sm:$0xff]
    %v372 = vld [vmem:[#allocation2 + $0x100] sm:$0xff]
    %v373 = vld [vmem:[#allocation2 + $0x108] sm:$0xff]
    %v374 = vld [vmem:[#allocation2 + $0x110] sm:$0xff]
    %v375 = vld [vmem:[#allocation2 + $0x118] sm:$0xff]
    %v376 = vld [vmem:[%s2] sm:$0xf]
    %378 = vset.pattern.permute.xlu0 0
    %379 = vperm.xlu0 %378, %v376
    %v380 = vpop.permute.xlu0 %379
    %vm382 = vcmask 588800
    %v384 = vsel %vm382, %v339, 0
    %386 = vmatprep.subr.mxu0 %v341
    %387 = vmatpush1.msra.mxu0 %v340
    %388 = vmatprep.subr.mxu0 %v345
    %389 = vmatpush1.msra.mxu0 %v344
    %390 = vmatprep.subr.mxu0 %v349
    %391 = vmatpush1.msra.mxu0 %v348
    %392 = vmatprep.subr.mxu0 %v353
    %393 = vmatpush1.msra.mxu0 %v352
    %394 = vmatprep.subr.mxu0 %v357
    %395 = vmatpush1.msra.mxu0 %v356
    %396 = vmatprep.subr.mxu0 %v361
    %397 = vmatpush1.msra.mxu0 %v360
    %398 = vmatprep.subr.mxu0 %v365
    %399 = vmatpush1.msra.mxu0 %v364
    %400 = vmatprep.subr.mxu0 %v369
    %401 = vmatpush1.msra.mxu0 %v368
    %402 = vmatprep.subr.mxu0 %v373
    %403 = vmatpush1.msra.mxu0 %v372
    %404 = vmatprep.subr.mxu0 0.0
    %405 = vmatpush1.msra.mxu0 0.0
    %406 = vmatprep.subr.mxu0 0.0
    %407 = vmatpush1.msra.mxu0 0.0
    %408 = vmatprep.subr.mxu0 0.0
    %409 = vmatpush1.msra.mxu0 0.0
    %410 = vmatprep.subr.mxu0 0.0
    %411 = vmatpush1.msra.mxu0 0.0
    %412 = vmatprep.subr.mxu0 0.0
    %413 = vmatpush1.msra.mxu0 0.0
    %414 = vmatprep.subr.mxu0 0.0
    %415 = vmatpush1.msra.mxu0 0.0
    %416 = vmatprep.subr.mxu0 0.0
    %417 = vmatpush1.msra.mxu0 0.0
    %418 = vmatprep.subr.mxu0 0.0
    %419 = vmatpush1.msra.mxu0 0.0
    %420 = vmatprep.subr.mxu0 0.0
    %421 = vmatpush1.msra.mxu0 0.0
    %422 = vmatprep.subr.mxu0 0.0
    %423 = vmatpush1.msra.mxu0 0.0
    %424 = vmatprep.subr.mxu0 0.0
    %425 = vmatpush1.msra.mxu0 0.0
    %426 = vmatprep.subr.mxu0 0.0
    %427 = vmatpush1.msra.mxu0 0.0
    %428 = vmatprep.subr.mxu0 0.0
    %429 = vmatpush1.msra.mxu0 0.0
    %430 = vmatprep.subr.mxu0 0.0
    %431 = vmatpush1.msra.mxu0 0.0
    %432 = vmatprep.subr.mxu0 0.0
    %433 = vmatpush1.msra.mxu0 0.0
    %434 = vmatprep.subr.mxu0 0.0
    %435 = vmatpush1.msra.mxu0 0.0
    %436 = vmatprep.subr.mxu0 0.0
    %437 = vmatpush1.msra.mxu0 0.0
    %438 = vmatprep.subr.mxu0 0.0
    %439 = vmatpush1.msra.mxu0 0.0
    %440 = vmatprep.subr.mxu0 0.0
    %441 = vmatpush1.msra.mxu0 0.0
    %442 = vmatprep.subr.mxu0 0.0
    %443 = vmatpush1.msra.mxu0 0.0
    %444 = vmatprep.subr.mxu0 0.0
    %445 = vmatpush1.msra.mxu0 0.0
    %446 = vmatprep.subr.mxu0 0.0
    %447 = vmatpush1.msra.mxu0 0.0
    %448 = vmatprep.subr.mxu0 0.0
    %449 = vmatpush1.msra.mxu0 0.0
    %450 = vmatprep.mubr.f32.mxu0 0.0
    %451 = vmatmul.mubr.f32.gmra.mrb[0].mxu0 %v384
    %v452 = vpop.f32.mrb[0].mxu0
    %v453 = vadd.f32 %v380, %v452
    %v454 = vpop.f32.mrb[0].mxu0
    %v455 = vadd.f32 %v380, %v454
    %456 = vdwg.mxu0
    %457 = vmatprep.subr.mxu0 %v343
    %458 = vmatpush1.msra.mxu0 %v342
    %459 = vmatprep.subr.mxu0 %v347
    %460 = vmatpush1.msra.mxu0 %v346
    %461 = vmatprep.subr.mxu0 %v351
    %462 = vmatpush1.msra.mxu0 %v350
    %463 = vmatprep.subr.mxu0 %v355
    %464 = vmatpush1.msra.mxu0 %v354
    %465 = vmatprep.subr.mxu0 %v359
    %466 = vmatpush1.msra.mxu0 %v358
    %467 = vmatprep.subr.mxu0 %v363
    %468 = vmatpush1.msra.mxu0 %v362
    %469 = vmatprep.subr.mxu0 %v367
    %470 = vmatpush1.msra.mxu0 %v366
    %471 = vmatprep.subr.mxu0 %v371
    %472 = vmatpush1.msra.mxu0 %v370
    %473 = vmatprep.subr.mxu0 %v375
    %474 = vmatpush1.msra.mxu0 %v374
    %475 = vmatprep.subr.mxu0 0.0
    %476 = vmatpush1.msra.mxu0 0.0
    %477 = vmatprep.subr.mxu0 0.0
    %478 = vmatpush1.msra.mxu0 0.0
    %479 = vmatprep.subr.mxu0 0.0
    %480 = vmatpush1.msra.mxu0 0.0
    %481 = vmatprep.subr.mxu0 0.0
    %482 = vmatpush1.msra.mxu0 0.0
    %483 = vmatprep.subr.mxu0 0.0
    %484 = vmatpush1.msra.mxu0 0.0
    %485 = vmatprep.subr.mxu0 0.0
    %486 = vmatpush1.msra.mxu0 0.0
    %487 = vmatprep.subr.mxu0 0.0
    %488 = vmatpush1.msra.mxu0 0.0
    %489 = vmatprep.subr.mxu0 0.0
    %490 = vmatpush1.msra.mxu0 0.0
    %491 = vmatprep.subr.mxu0 0.0
    %492 = vmatpush1.msra.mxu0 0.0
    %493 = vmatprep.subr.mxu0 0.0
    %494 = vmatpush1.msra.mxu0 0.0
    %495 = vmatprep.subr.mxu0 0.0
    %496 = vmatpush1.msra.mxu0 0.0
    %497 = vmatprep.subr.mxu0 0.0
    %498 = vmatpush1.msra.mxu0 0.0
    %499 = vmatprep.subr.mxu0 0.0
    %500 = vmatpush1.msra.mxu0 0.0
    %501 = vmatprep.subr.mxu0 0.0
    %502 = vmatpush1.msra.mxu0 0.0
    %503 = vmatprep.subr.mxu0 0.0
    %504 = vmatpush1.msra.mxu0 0.0
    %505 = vmatprep.subr.mxu0 0.0
    %506 = vmatpush1.msra.mxu0 0.0
    %507 = vmatprep.subr.mxu0 0.0
    %508 = vmatpush1.msra.mxu0 0.0
    %509 = vmatprep.subr.mxu0 0.0
    %510 = vmatpush1.msra.mxu0 0.0
    %511 = vmatprep.subr.mxu0 0.0
    %512 = vmatpush1.msra.mxu0 0.0
    %513 = vmatprep.subr.mxu0 0.0
    %514 = vmatpush1.msra.mxu0 0.0
    %515 = vmatprep.subr.mxu0 0.0
    %516 = vmatpush1.msra.mxu0 0.0
    %517 = vmatprep.subr.mxu0 0.0
    %518 = vmatpush1.msra.mxu0 0.0
    %519 = vmatprep.subr.mxu0 0.0
    %520 = vmatpush1.msra.mxu0 0.0
    %521 = vmatprep.mubr.f32.mxu0 0.0
    %522 = vmatmul.mubr.f32.gmra.mrb[0].mxu0 %v384
    %v523 = vpop.f32.mrb[0].mxu0
    %v524 = vadd.f32 %v380, %v523
    %v525 = vpop.f32.mrb[0].mxu0
    %v526 = vadd.f32 %v380, %v525
    %527 = vdwg.mxu0
    %v528 = vmax.f32 %v453, 0.0
    %v529 = vmax.f32 %v455, 0.0
    %v530 = vmax.f32 %v524, 0.0
    %v531 = vmax.f32 %v526, 0.0
    %532 = vrot.lane.b32.xlu0 %v528, 17
    %v533 = vpop.permute.xlu0 %532
    %534 = vrot.lane.b32.xlu0 %v529, 17
    %v535 = vpop.permute.xlu0 %534
    %536 = vrot.lane.b32.xlu0 %v530, 17
    %v537 = vpop.permute.xlu0 %536
    %538 = vrot.lane.b32.xlu0 %v531, 17
    %v539 = vpop.permute.xlu0 %538
    %v540 = vsel %vm104, %v537, %v539
    %v541 = vsel %vm104, %v535, %v537
    %v542 = vsel %vm104, %v533, %v535
    %v543 = vsel %vm104, %v539, %v533
    %v544 = vld [vmem:[#allocation6] sm:$0xff]
    %v545 = vld [vmem:[#allocation6 + $0x8] sm:$0xff]
    %v548 = vcombine.high %v544, %v544
    %v549 = vcombine.high %v545, %v545
    %v552 = vmul.f32 %v543, %v544
    %v553 = vmul.f32 %v542, %v548
    %v554 = vmul.f32 %v541, %v545
    %v555 = vmul.f32 %v540, %v549
    %556 = vst [vmem:[#allocation2] sm:$0xf] %v552
    %557 = vst [vmem:[#allocation2 + $0x8] sm:$0xf] %v553
    %558 = vst [vmem:[#allocation2 + $0x10] sm:$0xf] %v554
    %559 = vst [vmem:[#allocation2 + $0x18] sm:$0xf] %v555
    %560 = vrot.lane.b32.xlu0 %v528, 16
    %v561 = vpop.permute.xlu0 %560
    %562 = vrot.lane.b32.xlu0 %v529, 16
    %v563 = vpop.permute.xlu0 %562
    %564 = vrot.lane.b32.xlu0 %v530, 16
    %v565 = vpop.permute.xlu0 %564
    %566 = vrot.lane.b32.xlu0 %v531, 16
    %v567 = vpop.permute.xlu0 %566
    %v568 = vsel %vm133, %v565, %v567
    %v569 = vsel %vm133, %v563, %v565
    %v570 = vsel %vm133, %v561, %v563
    %v571 = vsel %vm133, %v567, %v561
    %v572 = vld [vmem:[%s138] sm:$0xff]
    %v573 = vld [vmem:[%s138 + $0x8] sm:$0xff]
    %v576 = vcombine.high %v572, %v572
    %v577 = vcombine.high %v573, %v573
    %v580 = vmul.f32 %v571, %v572
    %v581 = vmul.f32 %v570, %v576
    %v582 = vmul.f32 %v569, %v573
    %v583 = vmul.f32 %v568, %v577
    %584 = vst [vmem:[#allocation2 + $0x20] sm:$0xf] %v580
    %585 = vst [vmem:[#allocation2 + $0x28] sm:$0xf] %v581
    %586 = vst [vmem:[#allocation2 + $0x30] sm:$0xf] %v582
    %587 = vst [vmem:[#allocation2 + $0x38] sm:$0xf] %v583
    %588 = vrot.lane.b32.xlu0 %v528, 15
    %v589 = vpop.permute.xlu0 %588
    %590 = vrot.lane.b32.xlu0 %v529, 15
    %v591 = vpop.permute.xlu0 %590
    %592 = vrot.lane.b32.xlu0 %v530, 15
    %v593 = vpop.permute.xlu0 %592
    %594 = vrot.lane.b32.xlu0 %v531, 15
    %v595 = vpop.permute.xlu0 %594
    %v596 = vsel %vm163, %v593, %v595
    %v597 = vsel %vm163, %v591, %v593
    %v598 = vsel %vm163, %v589, %v591
    %v599 = vsel %vm163, %v595, %v589
    %v600 = vld [vmem:[%s168] sm:$0xff]
    %v601 = vld [vmem:[%s168 + $0x8] sm:$0xff]
    %v604 = vcombine.high %v600, %v600
    %v605 = vcombine.high %v601, %v601
    %v608 = vmul.f32 %v599, %v600
    %v609 = vmul.f32 %v598, %v604
    %v610 = vmul.f32 %v597, %v601
    %v611 = vmul.f32 %v596, %v605
    %612 = vst [vmem:[#allocation2 + $0x40] sm:$0xf] %v608
    %613 = vst [vmem:[#allocation2 + $0x48] sm:$0xf] %v609
    %614 = vst [vmem:[#allocation2 + $0x50] sm:$0xf] %v610
    %615 = vst [vmem:[#allocation2 + $0x58] sm:$0xf] %v611
    %616 = vrot.lane.b32.xlu0 %v528, 1
    %v617 = vpop.permute.xlu0 %616
    %618 = vrot.lane.b32.xlu0 %v529, 1
    %v619 = vpop.permute.xlu0 %618
    %620 = vrot.lane.b32.xlu0 %v530, 1
    %v621 = vpop.permute.xlu0 %620
    %622 = vrot.lane.b32.xlu0 %v531, 1
    %v623 = vpop.permute.xlu0 %622
    %v624 = vsel %vm193, %v621, %v623
    %v625 = vsel %vm193, %v619, %v621
    %v626 = vsel %vm193, %v617, %v619
    %v627 = vsel %vm193, %v623, %v617
    %v628 = vld [vmem:[%s198] sm:$0xff]
    %v629 = vld [vmem:[%s198 + $0x8] sm:$0xff]
    %v632 = vcombine.high %v628, %v628
    %v633 = vcombine.high %v629, %v629
    %v636 = vmul.f32 %v627, %v628
    %v637 = vmul.f32 %v626, %v632
    %v638 = vmul.f32 %v625, %v629
    %v639 = vmul.f32 %v624, %v633
    %640 = vst [vmem:[#allocation2 + $0x60] sm:$0xf] %v636
    %641 = vst [vmem:[#allocation2 + $0x68] sm:$0xf] %v637
    %642 = vst [vmem:[#allocation2 + $0x70] sm:$0xf] %v638
    %643 = vst [vmem:[#allocation2 + $0x78] sm:$0xf] %v639
    %644 = vst [vmem:[#allocation2 + $0x80] sm:$0xf] %v528
    %645 = vst [vmem:[#allocation2 + $0x88] sm:$0xf] %v529
    %646 = vst [vmem:[#allocation2 + $0x90] sm:$0xf] %v530
    %647 = vst [vmem:[#allocation2 + $0x98] sm:$0xf] %v531
    %648 = vrot.lane.b32.xlu0 %v528, 127
    %v649 = vpop.permute.xlu0 %648
    %650 = vrot.lane.b32.xlu0 %v529, 127
    %v651 = vpop.permute.xlu0 %650
    %652 = vrot.lane.b32.xlu0 %v530, 127
    %v653 = vpop.permute.xlu0 %652
    %654 = vrot.lane.b32.xlu0 %v531, 127
    %v655 = vpop.permute.xlu0 %654
    %v656 = vsel %vm227, %v653, %v655
    %v657 = vsel %vm227, %v651, %v653
    %v658 = vsel %vm227, %v649, %v651
    %v659 = vsel %vm227, %v655, %v649
    %v660 = vld [vmem:[%s232] sm:$0xff]
    %v661 = vld [vmem:[%s232 + $0x8] sm:$0xff]
    %v664 = vcombine.high %v660, %v660
    %v665 = vcombine.high %v661, %v661
    %v668 = vmul.f32 %v658, %v660
    %v669 = vmul.f32 %v657, %v664
    %v670 = vmul.f32 %v656, %v661
    %v671 = vmul.f32 %v659, %v665
    %672 = vst [vmem:[#allocation2 + $0xa0] sm:$0xf] %v668
    %673 = vst [vmem:[#allocation2 + $0xa8] sm:$0xf] %v669
    %674 = vst [vmem:[#allocation2 + $0xb0] sm:$0xf] %v670
    %675 = vst [vmem:[#allocation2 + $0xb8] sm:$0xf] %v671
    %676 = vrot.lane.b32.xlu0 %v528, 113
    %v677 = vpop.permute.xlu0 %676
    %678 = vrot.lane.b32.xlu0 %v529, 113
    %v679 = vpop.permute.xlu0 %678
    %680 = vrot.lane.b32.xlu0 %v530, 113
    %v681 = vpop.permute.xlu0 %680
    %682 = vrot.lane.b32.xlu0 %v531, 113
    %v683 = vpop.permute.xlu0 %682
    %v684 = vsel %vm257, %v681, %v683
    %v685 = vsel %vm257, %v679, %v681
    %v686 = vsel %vm257, %v677, %v679
    %v687 = vsel %vm257, %v683, %v677
    %v688 = vld [vmem:[%s262] sm:$0xff]
    %v689 = vld [vmem:[%s262 + $0x8] sm:$0xff]
    %v692 = vcombine.high %v688, %v688
    %v693 = vcombine.high %v689, %v689
    %v696 = vmul.f32 %v686, %v688
    %v697 = vmul.f32 %v685, %v692
    %v698 = vmul.f32 %v684, %v689
    %v699 = vmul.f32 %v687, %v693
    %700 = vst [vmem:[#allocation2 + $0xc0] sm:$0xf] %v696
    %701 = vst [vmem:[#allocation2 + $0xc8] sm:$0xf] %v697
    %702 = vst [vmem:[#allocation2 + $0xd0] sm:$0xf] %v698
    %703 = vst [vmem:[#allocation2 + $0xd8] sm:$0xf] %v699
    %704 = vrot.lane.b32.xlu0 %v528, 112
    %v705 = vpop.permute.xlu0 %704
    %706 = vrot.lane.b32.xlu0 %v529, 112
    %v707 = vpop.permute.xlu0 %706
    %708 = vrot.lane.b32.xlu0 %v530, 112
    %v709 = vpop.permute.xlu0 %708
    %710 = vrot.lane.b32.xlu0 %v531, 112
    %v711 = vpop.permute.xlu0 %710
    %v712 = vsel %vm287, %v709, %v711
    %v713 = vsel %vm287, %v707, %v709
    %v714 = vsel %vm287, %v705, %v707
    %v715 = vsel %vm287, %v711, %v705
    %v716 = vld [vmem:[%s292] sm:$0xff]
    %v717 = vld [vmem:[%s292 + $0x8] sm:$0xff]
    %v720 = vcombine.high %v716, %v716
    %v721 = vcombine.high %v717, %v717
    %v724 = vmul.f32 %v714, %v716
    %v725 = vmul.f32 %v713, %v720
    %v726 = vmul.f32 %v712, %v717
    %v727 = vmul.f32 %v715, %v721
    %728 = vst [vmem:[#allocation2 + $0xe0] sm:$0xf] %v724
    %729 = vst [vmem:[#allocation2 + $0xe8] sm:$0xf] %v725
    %730 = vst [vmem:[#allocation2 + $0xf0] sm:$0xf] %v726
    %731 = vst [vmem:[#allocation2 + $0xf8] sm:$0xf] %v727
    %732 = vrot.lane.b32.xlu0 %v528, 111
    %v733 = vpop.permute.xlu0 %732
    %734 = vrot.lane.b32.xlu0 %v529, 111
    %v735 = vpop.permute.xlu0 %734
    %736 = vrot.lane.b32.xlu0 %v530, 111
    %v737 = vpop.permute.xlu0 %736
    %738 = vrot.lane.b32.xlu0 %v531, 111
    %v739 = vpop.permute.xlu0 %738
    %v740 = vsel %vm317, %v737, %v739
    %v741 = vsel %vm317, %v735, %v737
    %v742 = vsel %vm317, %v733, %v735
    %v743 = vsel %vm317, %v739, %v733
    %v744 = vld [vmem:[%s322] sm:$0xff]
    %v745 = vld [vmem:[%s322 + $0x8] sm:$0xff]
    %v748 = vcombine.high %v744, %v744
    %v749 = vcombine.high %v745, %v745
    %v752 = vmul.f32 %v742, %v744
    %v753 = vmul.f32 %v741, %v748
    %v754 = vmul.f32 %v740, %v745
    %v755 = vmul.f32 %v743, %v749
    %756 = vst [vmem:[#allocation2 + $0x100] sm:$0xf] %v752
    %757 = vst [vmem:[#allocation2 + $0x108] sm:$0xf] %v753
    %758 = vst [vmem:[#allocation2 + $0x110] sm:$0xf] %v754
    %759 = vst [vmem:[#allocation2 + $0x118] sm:$0xf] %v755
    %v760 = vld [vmem:[%s3] sm:$0xf]
    %v761 = vld [vmem:[#allocation2] sm:$0xff]
    %v762 = vld [vmem:[#allocation2 + $0x8] sm:$0xff]
    %v763 = vld [vmem:[#allocation2 + $0x10] sm:$0xff]
    %v764 = vld [vmem:[#allocation2 + $0x18] sm:$0xff]
    %v765 = vld [vmem:[#allocation2 + $0x20] sm:$0xff]
    %v766 = vld [vmem:[#allocation2 + $0x28] sm:$0xff]
    %v767 = vld [vmem:[#allocation2 + $0x30] sm:$0xff]
    %v768 = vld [vmem:[#allocation2 + $0x38] sm:$0xff]
    %v769 = vld [vmem:[#allocation2 + $0x40] sm:$0xff]
    %v770 = vld [vmem:[#allocation2 + $0x48] sm:$0xff]
    %v771 = vld [vmem:[#allocation2 + $0x50] sm:$0xff]
    %v772 = vld [vmem:[#allocation2 + $0x58] sm:$0xff]
    %v773 = vld [vmem:[#allocation2 + $0x60] sm:$0xff]
    %v774 = vld [vmem:[#allocation2 + $0x68] sm:$0xff]
    %v775 = vld [vmem:[#allocation2 + $0x70] sm:$0xff]
    %v776 = vld [vmem:[#allocation2 + $0x78] sm:$0xff]
    %v777 = vld [vmem:[#allocation2 + $0x80] sm:$0xff]
    %v778 = vld [vmem:[#allocation2 + $0x88] sm:$0xff]
    %v779 = vld [vmem:[#allocation2 + $0x90] sm:$0xff]
    %v780 = vld [vmem:[#allocation2 + $0x98] sm:$0xff]
    %v781 = vld [vmem:[#allocation2 + $0xa0] sm:$0xff]
    %v782 = vld [vmem:[#allocation2 + $0xa8] sm:$0xff]
    %v783 = vld [vmem:[#allocation2 + $0xb0] sm:$0xff]
    %v784 = vld [vmem:[#allocation2 + $0xb8] sm:$0xff]
    %v785 = vld [vmem:[#allocation2 + $0xc0] sm:$0xff]
    %v786 = vld [vmem:[#allocation2 + $0xc8] sm:$0xff]
    %v787 = vld [vmem:[#allocation2 + $0xd0] sm:$0xff]
    %v788 = vld [vmem:[#allocation2 + $0xd8] sm:$0xff]
    %v789 = vld [vmem:[#allocation2 + $0xe0] sm:$0xff]
    %v790 = vld [vmem:[#allocation2 + $0xe8] sm:$0xff]
    %v791 = vld [vmem:[#allocation2 + $0xf0] sm:$0xff]
    %v792 = vld [vmem:[#allocation2 + $0xf8] sm:$0xff]
    %v793 = vld [vmem:[#allocation2 + $0x100] sm:$0xff]
    %v794 = vld [vmem:[#allocation2 + $0x108] sm:$0xff]
    %v795 = vld [vmem:[#allocation2 + $0x110] sm:$0xff]
    %v796 = vld [vmem:[#allocation2 + $0x118] sm:$0xff]
    %v797 = vld [vmem:[%s4] sm:$0xf]
    %799 = vset.pattern.permute.xlu0 0
    %800 = vperm.xlu0 %799, %v797
    %v801 = vpop.permute.xlu0 %800
    %v804 = vsel %vm382, %v760, 0
    %806 = vmatprep.subr.mxu0 %v762
    %807 = vmatpush1.msra.mxu0 %v761
    %808 = vmatprep.subr.mxu0 %v766
    %809 = vmatpush1.msra.mxu0 %v765
    %810 = vmatprep.subr.mxu0 %v770
    %811 = vmatpush1.msra.mxu0 %v769
    %812 = vmatprep.subr.mxu0 %v774
    %813 = vmatpush1.msra.mxu0 %v773
    %814 = vmatprep.subr.mxu0 %v778
    %815 = vmatpush1.msra.mxu0 %v777
    %816 = vmatprep.subr.mxu0 %v782
    %817 = vmatpush1.msra.mxu0 %v781
    %818 = vmatprep.subr.mxu0 %v786
    %819 = vmatpush1.msra.mxu0 %v785
    %820 = vmatprep.subr.mxu0 %v790
    %821 = vmatpush1.msra.mxu0 %v789
    %822 = vmatprep.subr.mxu0 %v794
    %823 = vmatpush1.msra.mxu0 %v793
    %824 = vmatprep.subr.mxu0 0.0
    %825 = vmatpush1.msra.mxu0 0.0
    %826 = vmatprep.subr.mxu0 0.0
    %827 = vmatpush1.msra.mxu0 0.0
    %828 = vmatprep.subr.mxu0 0.0
    %829 = vmatpush1.msra.mxu0 0.0
    %830 = vmatprep.subr.mxu0 0.0
    %831 = vmatpush1.msra.mxu0 0.0
    %832 = vmatprep.subr.mxu0 0.0
    %833 = vmatpush1.msra.mxu0 0.0
    %834 = vmatprep.subr.mxu0 0.0
    %835 = vmatpush1.msra.mxu0 0.0
    %836 = vmatprep.subr.mxu0 0.0
    %837 = vmatpush1.msra.mxu0 0.0
    %838 = vmatprep.subr.mxu0 0.0
    %839 = vmatpush1.msra.mxu0 0.0
    %840 = vmatprep.subr.mxu0 0.0
    %841 = vmatpush1.msra.mxu0 0.0
    %842 = vmatprep.subr.mxu0 0.0
    %843 = vmatpush1.msra.mxu0 0.0
    %844 = vmatprep.subr.mxu0 0.0
    %845 = vmatpush1.msra.mxu0 0.0
    %846 = vmatprep.subr.mxu0 0.0
    %847 = vmatpush1.msra.mxu0 0.0
    %848 = vmatprep.subr.mxu0 0.0
    %849 = vmatpush1.msra.mxu0 0.0
    %850 = vmatprep.subr.mxu0 0.0
    %851 = vmatpush1.msra.mxu0 0.0
    %852 = vmatprep.subr.mxu0 0.0
    %853 = vmatpush1.msra.mxu0 0.0
    %854 = vmatprep.subr.mxu0 0.0
    %855 = vmatpush1.msra.mxu0 0.0
    %856 = vmatprep.subr.mxu0 0.0
    %857 = vmatpush1.msra.mxu0 0.0
    %858 = vmatprep.subr.mxu0 0.0
    %859 = vmatpush1.msra.mxu0 0.0
    %860 = vmatprep.subr.mxu0 0.0
    %861 = vmatpush1.msra.mxu0 0.0
    %862 = vmatprep.subr.mxu0 0.0
    %863 = vmatpush1.msra.mxu0 0.0
    %864 = vmatprep.subr.mxu0 0.0
    %865 = vmatpush1.msra.mxu0 0.0
    %866 = vmatprep.subr.mxu0 0.0
    %867 = vmatpush1.msra.mxu0 0.0
    %868 = vmatprep.subr.mxu0 0.0
    %869 = vmatpush1.msra.mxu0 0.0
    %870 = vmatprep.mubr.f32.mxu0 0.0
    %871 = vmatmul.mubr.f32.gmra.mrb[0].mxu0 %v804
    %v872 = vpop.f32.mrb[0].mxu0
    %v873 = vadd.f32 %v801, %v872
    %v874 = vpop.f32.mrb[0].mxu0
    %v875 = vadd.f32 %v801, %v874
    %876 = vdwg.mxu0
    %877 = vmatprep.subr.mxu0 %v764
    %878 = vmatpush1.msra.mxu0 %v763
    %879 = vmatprep.subr.mxu0 %v768
    %880 = vmatpush1.msra.mxu0 %v767
    %881 = vmatprep.subr.mxu0 %v772
    %882 = vmatpush1.msra.mxu0 %v771
    %883 = vmatprep.subr.mxu0 %v776
    %884 = vmatpush1.msra.mxu0 %v775
    %885 = vmatprep.subr.mxu0 %v780
    %886 = vmatpush1.msra.mxu0 %v779
    %887 = vmatprep.subr.mxu0 %v784
    %888 = vmatpush1.msra.mxu0 %v783
    %889 = vmatprep.subr.mxu0 %v788
    %890 = vmatpush1.msra.mxu0 %v787
    %891 = vmatprep.subr.mxu0 %v792
    %892 = vmatpush1.msra.mxu0 %v791
    %893 = vmatprep.subr.mxu0 %v796
    %894 = vmatpush1.msra.mxu0 %v795
    %895 = vmatprep.subr.mxu0 0.0
    %896 = vmatpush1.msra.mxu0 0.0
    %897 = vmatprep.subr.mxu0 0.0
    %898 = vmatpush1.msra.mxu0 0.0
    %899 = vmatprep.subr.mxu0 0.0
    %900 = vmatpush1.msra.mxu0 0.0
    %901 = vmatprep.subr.mxu0 0.0
    %902 = vmatpush1.msra.mxu0 0.0
    %903 = vmatprep.subr.mxu0 0.0
    %904 = vmatpush1.msra.mxu0 0.0
    %905 = vmatprep.subr.mxu0 0.0
    %906 = vmatpush1.msra.mxu0 0.0
    %907 = vmatprep.subr.mxu0 0.0
    %908 = vmatpush1.msra.mxu0 0.0
    %909 = vmatprep.subr.mxu0 0.0
    %910 = vmatpush1.msra.mxu0 0.0
    %911 = vmatprep.subr.mxu0 0.0
    %912 = vmatpush1.msra.mxu0 0.0
    %913 = vmatprep.subr.mxu0 0.0
    %914 = vmatpush1.msra.mxu0 0.0
    %915 = vmatprep.subr.mxu0 0.0
    %916 = vmatpush1.msra.mxu0 0.0
    %917 = vmatprep.subr.mxu0 0.0
    %918 = vmatpush1.msra.mxu0 0.0
    %919 = vmatprep.subr.mxu0 0.0
    %920 = vmatpush1.msra.mxu0 0.0
    %921 = vmatprep.subr.mxu0 0.0
    %922 = vmatpush1.msra.mxu0 0.0
    %923 = vmatprep.subr.mxu0 0.0
    %924 = vmatpush1.msra.mxu0 0.0
    %925 = vmatprep.subr.mxu0 0.0
    %926 = vmatpush1.msra.mxu0 0.0
    %927 = vmatprep.subr.mxu0 0.0
    %928 = vmatpush1.msra.mxu0 0.0
    %929 = vmatprep.subr.mxu0 0.0
    %930 = vmatpush1.msra.mxu0 0.0
    %931 = vmatprep.subr.mxu0 0.0
    %932 = vmatpush1.msra.mxu0 0.0
    %933 = vmatprep.subr.mxu0 0.0
    %934 = vmatpush1.msra.mxu0 0.0
    %935 = vmatprep.subr.mxu0 0.0
    %936 = vmatpush1.msra.mxu0 0.0
    %937 = vmatprep.subr.mxu0 0.0
    %938 = vmatpush1.msra.mxu0 0.0
    %939 = vmatprep.subr.mxu0 0.0
    %940 = vmatpush1.msra.mxu0 0.0
    %941 = vmatprep.mubr.f32.mxu0 0.0
    %942 = vmatmul.mubr.f32.gmra.mrb[0].mxu0 %v804
    %v943 = vpop.f32.mrb[0].mxu0
    %v944 = vadd.f32 %v801, %v943
    %v945 = vpop.f32.mrb[0].mxu0
    %v946 = vadd.f32 %v801, %v945
    %947 = vdwg.mxu0
    %v948 = vadd.f32 %v873, %v86
    %v949 = vadd.f32 %v875, %v90
    %v950 = vadd.f32 %v944, %v87
    %v951 = vadd.f32 %v946, %v91
    %v952 = vmax.f32 %v948, 0.0
    %v953 = vmax.f32 %v949, 0.0
    %v954 = vmax.f32 %v950, 0.0
    %v955 = vmax.f32 %v951, 0.0
    %v960 = vcombine.low %v952, %v953
    %v961 = vcombine.low %v954, %v955
    %964 = vst [vmem:[#allocation8] sm:$0xff] %v960
    %965 = vst [vmem:[#allocation8 + $0x8] sm:$0xff] %v961
    // Predicated region
    $region34: #{tpu_custom_call.1} parent=1 // pred_check
      _
    $region35: #{tpu_custom_call.1} parent=1 // pred_check_branch
      %967 = sbr.rel (0) target = $region37
    $region36: #{tpu_custom_call.1} parent=1 // pred_region
      %s969 = ssub.s32 256, 256
      %970 = vsyncadd [#allocation5], %s969
      %s972 = sshll.u32 [#allocation8], 4
      %s973 = int_to_ptr.vmem [resolvable:$true] %s972
      %975 = dma.vmem_to_hbm [thread:$0]  %s973, 256, %s6, [#allocation5]
    $region37: #{tpu_custom_call.1} parent=1 // pred_fallthru
      _
    // Predicated region
    $region38: #{tpu_custom_call.1} parent=1 // pred_check
      _
    $region39: #{tpu_custom_call.1} parent=1 // pred_check_branch
      %977 = sbr.rel (0) target = $region41
    $region40: #{tpu_custom_call.1} parent=1 // pred_region
      %978 = dma.done [#allocation5], 256
    $region41: #{tpu_custom_call.1} parent=1 // pred_fallthru
      _
    %979 = vsyncpa [#allocation4], 1
    %980 = vsyncpa [#allocation7], 1
    %981 = vsyncpa [#allocation5], 1

</llo_original>
